<compile_context>
chip_gen: v7x
topology: tpu7x:2x2x1
jax: 0.10.0
libtpu: 0.0.40
codegen_flags: <defaults>
</compile_context>

<pallas_src>
import jax
import jax.numpy as jnp
from jax import lax
from jax.experimental import pallas as pl
from jax.experimental.pallas import tpu as pltpu


def _round_up(v, m):
    return ((v + m - 1) // m) * m


def _pick_div(extent, candidates):
    for c in candidates:
        if extent % c == 0:
            return c
    return 128


# -----------------------------------------------------------------------------
# FUSED path: resident weight/mask/neuron, modulation fused into the matmul.
# -----------------------------------------------------------------------------
def _fused_call(xp, wp, mp, np_, bp, Mp, Np, Kp, tm, tn, compute_dtype, out_dtype):
    def kernel(x_ref, w_ref, m_ref, n_ref, b_ref, o_ref):
        j = pl.program_id(1)
        off = pl.multiple_of(j * tn, 128)
        # Modulation recomputed per (tn, Kp) tile from VMEM-resident inputs
        # (pure VPU work, hidden under the MXU; W_eff never touches HBM).
        w = w_ref[pl.ds(off, tn), :].astype(jnp.float32)
        m = m_ref[pl.ds(off, tn), :].astype(jnp.float32)
        n = n_ref[pl.ds(off, tn), :].astype(jnp.float32)
        w_eff = (w * (1.0 + m * n)).astype(compute_dtype)
        # Contract the shared K axis without materializing a transpose of W.
        acc = lax.dot_general(
            x_ref[...], w_eff,
            dimension_numbers=(((1,), (1,)), ((), ())),
            preferred_element_type=jnp.float32)
        acc = acc + b_ref[...]
        o_ref[...] = acc.astype(o_ref.dtype)

    return pl.pallas_call(
        kernel,
        out_shape=jax.ShapeDtypeStruct((Mp, Np), out_dtype),
        grid=(Mp // tm, Np // tn),
        in_specs=[
            pl.BlockSpec((tm, Kp), lambda i, j: (i, 0)),   # x: fetched once per M tile
            pl.BlockSpec((Np, Kp), lambda i, j: (0, 0)),   # weight: resident (1 DMA total)
            pl.BlockSpec((Np, Kp), lambda i, j: (0, 0)),   # mask:   resident
            pl.BlockSpec((Np, Kp), lambda i, j: (0, 0)),   # neuron: resident
            pl.BlockSpec((1, tn), lambda i, j: (0, j)),    # bias tile
        ],
        out_specs=pl.BlockSpec((tm, tn), lambda i, j: (i, j)),
        compiler_params=pltpu.CompilerParams(
            dimension_semantics=("parallel", "parallel"),
            vmem_limit_bytes=48 * 1024 * 1024),
    )(xp, wp, mp, np_, bp)


# -----------------------------------------------------------------------------
# TILED fallback kernel 1: hoisted modulation  W_eff = W * (1 + mask * neuron)
# -----------------------------------------------------------------------------
def _modulate_kernel(w_ref, m_ref, n_ref, o_ref):
    w = w_ref[...].astype(jnp.float32)
    m = m_ref[...].astype(jnp.float32)
    n = n_ref[...].astype(jnp.float32)
    o_ref[...] = (w * (1.0 + m * n)).astype(o_ref.dtype)


def _modulated_weight(wp, mp, np_, Np, Kp, compute_dtype):
    """Inputs already padded to (Np, Kp) in their ORIGINAL dtype (no f32 copy)."""
    tn = _pick_div(Np, (512, 256, 128))
    tk = _pick_div(Kp, (512, 256, 128))
    spec = pl.BlockSpec((tn, tk), lambda i, j: (i, j))
    return pl.pallas_call(
        _modulate_kernel,
        out_shape=jax.ShapeDtypeStruct((Np, Kp), compute_dtype),
        grid=(Np // tn, Kp // tk),
        in_specs=[spec, spec, spec],
        out_specs=spec,
        compiler_params=pltpu.CompilerParams(
            dimension_semantics=("parallel", "parallel")),
    )(wp, mp, np_)


# -----------------------------------------------------------------------------
# TILED fallback kernel 2: out = x @ W_eff^T + bias  (K reduction, f32 acc)
# -----------------------------------------------------------------------------
def _matmul_bias_kernel(x_ref, w_ref, b_ref, o_ref, acc_ref):
    # x_ref: (tm, tk)   w_ref: (tn, tk)   b_ref: (1, tn)   o_ref: (tm, tn)
    k = pl.program_id(2)

    @pl.when(k == 0)
    def _():
        acc_ref[...] = jnp.zeros_like(acc_ref)

    acc_ref[...] += lax.dot_general(
        x_ref[...], w_ref[...],
        dimension_numbers=(((1,), (1,)), ((), ())),
        preferred_element_type=jnp.float32)

    @pl.when(k == pl.num_programs(2) - 1)
    def _():
        o_ref[...] = (acc_ref[...] + b_ref[...]).astype(o_ref.dtype)


# -----------------------------------------------------------------------------
# Shared driver
# -----------------------------------------------------------------------------
def _concept_matmul(x2d, w2d, mask2d, neuron2d, bias, *,
                    compute_dtype=jnp.bfloat16, out_dtype=None, force_tiled=False):
    """out = x2d @ (w2d * (1 + mask2d * neuron2d)).T + bias (f32 accumulation)."""
    M, K = x2d.shape
    Cout = w2d.shape[0]
    if out_dtype is None:
        out_dtype = x2d.dtype
    if bias is None:
        bias = jnp.zeros((Cout,), jnp.float32)

    # Lane-dense padding: only to 128 multiples (no 256/512 round-up blowup).
    Kp = _round_up(K, 128)
    Np = _round_up(Cout, 128)

    # M tiling: big tiles for im2col-sized M, >= 2 tiles for mid-size M (v7x).
    if M >= 1024:
        tm = 512
    elif M >= 512:
        tm = 256
    else:
        tm = _round_up(M, 8)
    Mp = _round_up(M, tm)

    if Np <= 256:
        tn = Np
    else:
        tn = _pick_div(Np, (256, 128))

    # Pad: x cast to compute_dtype (bf16 halves HBM read traffic), weight-side
    # arrays stay in their ORIGINAL dtype (cast happens inside the kernel).
    xp = jnp.pad(x2d.astype(compute_dtype), ((0, Mp - M), (0, Kp - K)))
    bp = jnp.pad(bias.astype(jnp.float32).reshape(1, Cout), ((0, 0), (0, Np - Cout)))
    pad_w = lambda a: jnp.pad(a, ((0, Np - Cout), (0, Kp - K)))
    wp, mp, np_ = pad_w(w2d), pad_w(mask2d), pad_w(neuron2d)

    # Fused-path gate: double-buffered resident weight/mask/neuron must fit a
    # conservative VMEM budget (safe for v7x's 64 MiB physical VMEM).
    in_bytes = wp.dtype.itemsize + mp.dtype.itemsize + np_.dtype.itemsize
    resident_bytes = 2 * Np * Kp * in_bytes
    use_fused = (not force_tiled) and resident_bytes <= 16 * 1024 * 1024 and Kp <= 4096

    if use_fused:
        out = _fused_call(xp, wp, mp, np_, bp, Mp, Np, Kp, tm, tn,
                          compute_dtype, out_dtype)
    else:
        # Hoisted modulation: weight-side HBM read exactly once, W_eff emitted
        # already in compute_dtype.
        w_eff = _modulated_weight(wp, mp, np_, Np, Kp, compute_dtype)
        tk = _pick_div(Kp, (512, 256, 128))
        out = pl.pallas_call(
            _matmul_bias_kernel,
            out_shape=jax.ShapeDtypeStruct((Mp, Np), out_dtype),
            grid=(Mp // tm, Np // tn, Kp // tk),
            in_specs=[
                pl.BlockSpec((tm, tk), lambda i, j, k: (i, k)),   # x tile
                pl.BlockSpec((tn, tk), lambda i, j, k: (j, k)),   # W_eff tile
                pl.BlockSpec((1, tn), lambda i, j, k: (0, j)),    # bias tile
            ],
            out_specs=pl.BlockSpec((tm, tn), lambda i, j, k: (i, j)),
            scratch_shapes=[pltpu.VMEM((tm, tn), jnp.float32)],
            compiler_params=pltpu.CompilerParams(
                dimension_semantics=("parallel", "parallel", "arbitrary"),
                vmem_limit_bytes=48 * 1024 * 1024),
        )(xp, w_eff, bp)
    return out[:M, :Cout]


# -----------------------------------------------------------------------------
# Plain-JAX glue: im2col for the Conv2d branch (NCHW)
# -----------------------------------------------------------------------------
def _im2col_nchw(x, kh, kw, stride, padding):
    N, C, H, W = x.shape
    sh, sw = stride
    ph, pw = padding
    xp = jnp.pad(x, ((0, 0), (0, 0), (ph, ph), (pw, pw)))
    OH = (H + 2 * ph - kh) // sh + 1
    OW = (W + 2 * pw - kw) // sw + 1
    cols = []
    for i in range(kh):
        for j in range(kw):
            cols.append(xp[:, :, i:i + sh * OH:sh, j:j + sw * OW:sw])  # (N,C,OH,OW)
    # ordering must match weight.reshape(Cout, C*kh*kw): index = c*(kh*kw) + i*kw + j
    cols = jnp.stack(cols, axis=2)                 # (N, C, kh*kw, OH, OW)
    cols = cols.reshape(N, C * kh * kw, OH, OW)
    patches = cols.transpose(0, 2, 3, 1).reshape(N * OH * OW, C * kh * kw)
    return patches, OH, OW


# -----------------------------------------------------------------------------
# ConceptModule forward equivalents
# -----------------------------------------------------------------------------
def concept_conv2d_forward(x, weight, bias, concept_mask, concept_neuron,
                           stride=(1, 1), padding=(1, 1), *,
                           compute_dtype=jnp.bfloat16, force_tiled=False):
    """x: (N, Cin, H, W) NCHW; weight/mask/neuron: (Cout, Cin, KH, KW); bias: (Cout,)."""
    N, Cin, H, W = x.shape
    Cout, _, KH, KW = weight.shape
    out_dtype = x.dtype
    # Cast once before patch extraction so the KH*KW-inflated patches matrix is
    # written/read in compute_dtype (half the HBM bytes for bf16).
    patches, OH, OW = _im2col_nchw(x.astype(compute_dtype), KH, KW, stride, padding)
    w2d = weight.reshape(Cout, Cin * KH * KW)
    m2d = concept_mask.reshape(Cout, Cin * KH * KW)
    n2d = concept_neuron.reshape(Cout, Cin * KH * KW)
    out = _concept_matmul(patches, w2d, m2d, n2d, bias,
                          compute_dtype=compute_dtype, out_dtype=out_dtype,
                          force_tiled=force_tiled)
    return out.reshape(N, OH, OW, Cout).transpose(0, 3, 1, 2)    # back to NCHW


def concept_linear_forward(x, weight, bias, concept_mask, concept_neuron, *,
                           compute_dtype=jnp.bfloat16, force_tiled=False):
    """x: (..., in_features); weight/mask/neuron: (out_features, in_features)."""
    lead = x.shape[:-1]
    x2d = x.reshape(-1, x.shape[-1])
    out = _concept_matmul(x2d, weight, concept_mask, concept_neuron, bias,
                          compute_dtype=compute_dtype, out_dtype=x.dtype,
                          force_tiled=force_tiled)
    return out.reshape(*lead, weight.shape[0])


# -----------------------------------------------------------------------------
# Reference (pure JAX) for verification
# -----------------------------------------------------------------------------
def _ref_conv2d(x, weight, bias, mask, neuron, stride, padding):
    w_eff = weight * (1.0 + mask * neuron)
    out = lax.conv_general_dilated(
        x, w_eff, window_strides=stride,
        padding=[(padding[0], padding[0]), (padding[1], padding[1])],
        dimension_numbers=("NCHW", "OIHW", "NCHW"))
    return out + bias.reshape(1, -1, 1, 1)


def _ref_linear(x, weight, bias, mask, neuron):
    w_eff = weight * (1.0 + mask * neuron)
    return x @ w_eff.T + bias


if __name__ == "__main__":
    key = jax.random.PRNGKey(0)
    k_x, k_w, k_b, k_n, k_xl, k_wl, k_bl, k_nl = jax.random.split(key, 8)

    # ---- Conv2d branch of ConceptModule ----
    N, Cin, H, W = 2, 4, 16, 16
    Cout, KH, KW = 8, 3, 3
    stride, padding = (1, 1), (1, 1)

    x = jax.random.normal(k_x, (N, Cin, H, W), jnp.float32)
    weight = jax.random.normal(k_w, (Cout, Cin, KH, KW), jnp.float32) * 0.1
    bias = jax.random.normal(k_b, (Cout,), jnp.float32) * 0.1
    concept_mask = jnp.ones((Cout, Cin, KH, KW), jnp.float32)       # nn.Parameter(ones_like)
    concept_neuron = jax.random.normal(k_n, (Cout, Cin, KH, KW), jnp.float32) * 0.05

    ref_conv = _ref_conv2d(x, weight, bias, concept_mask, concept_neuron, stride, padding)

    # fused path, strict f32 compute
    out_f32 = concept_conv2d_forward(x, weight, bias, concept_mask, concept_neuron,
                                     stride, padding, compute_dtype=jnp.float32)
    out_f32 = jax.block_until_ready(out_f32)
    assert out_f32.shape == (N, Cout, H, W)
    assert jnp.allclose(out_f32, ref_conv, atol=1e-4, rtol=1e-4)

    # fused path, default bf16 operands (f32 accumulation / f32 modulation)
    out_bf16 = concept_conv2d_forward(x, weight, bias, concept_mask, concept_neuron,
                                      stride, padding)
    out_bf16 = jax.block_until_ready(out_bf16)
    assert jnp.allclose(out_bf16, ref_conv, atol=5e-2, rtol=5e-2)

    # tiled fallback path (hoisted modulation + K-reduction matmul), strict f32
    out_tiled = concept_conv2d_forward(x, weight, bias, concept_mask, concept_neuron,
                                       stride, padding, compute_dtype=jnp.float32,
                                       force_tiled=True)
    out_tiled = jax.block_until_ready(out_tiled)
    assert jnp.allclose(out_tiled, ref_conv, atol=1e-4, rtol=1e-4)

    # ---- Linear branch of ConceptModule ----
    B, Fin, Fout = 8, 32, 16
    xl = jax.random.normal(k_xl, (B, Fin), jnp.float32)
    wl = jax.random.normal(k_wl, (Fout, Fin), jnp.float32) * 0.1
    bl = jax.random.normal(k_bl, (Fout,), jnp.float32) * 0.1
    ml = jnp.ones((Fout, Fin), jnp.float32)
    nl = jax.random.normal(k_nl, (Fout, Fin), jnp.float32) * 0.05

    ref_lin = _ref_linear(xl, wl, bl, ml, nl)

    out_lin_f32 = concept_linear_forward(xl, wl, bl, ml, nl, compute_dtype=jnp.float32)
    out_lin_f32 = jax.block_until_ready(out_lin_f32)
    assert out_lin_f32.shape == (B, Fout)
    assert jnp.allclose(out_lin_f32, ref_lin, atol=1e-4, rtol=1e-4)

    out_lin_bf16 = concept_linear_forward(xl, wl, bl, ml, nl)   # default bf16
    out_lin_bf16 = jax.block_until_ready(out_lin_bf16)
    assert jnp.allclose(out_lin_bf16, ref_lin, atol=5e-2, rtol=5e-2)

    out_lin_tiled = concept_linear_forward(xl, wl, bl, ml, nl, compute_dtype=jnp.float32,
                                           force_tiled=True)
    out_lin_tiled = jax.block_until_ready(out_lin_tiled)
    assert jnp.allclose(out_lin_tiled, ref_lin, atol=1e-4, rtol=1e-4)

    print("KERNEL_OK")
</pallas_src>

<mosaic_0001>
module attributes {stable_mosaic.version = 11 : i64} {
  func.func @kernel(%arg0: i32, %arg1: i32, %arg2: memref<256x128xf32, #tpu.memory_space<vmem>>, %arg3: memref<128x128xf32, #tpu.memory_space<vmem>>, %arg4: memref<128x128xf32, #tpu.memory_space<vmem>>, %arg5: memref<128x128xf32, #tpu.memory_space<vmem>>, %arg6: memref<1x128xf32, #tpu.memory_space<vmem>>, %arg7: memref<256x128xf32, #tpu.memory_space<vmem>>) attributes {dimension_semantics = [#tpu.dimension_semantics<parallel>, #tpu.dimension_semantics<parallel>], iteration_bounds = array<i64: 2, 1>, scalar_prefetch = 0 : i64, scratch_operands = 0 : i64, tpu.core_type = #tpu.core_type<tc>, window_params = [{transform_indices = @transform_0, window_bounds = array<i64: 256, 128>}, {pipeline_mode = #tpu.pipeline_mode<synchronous>, transform_indices = @transform_1, window_bounds = array<i64: 128, 128>}, {pipeline_mode = #tpu.pipeline_mode<synchronous>, transform_indices = @transform_2, window_bounds = array<i64: 128, 128>}, {pipeline_mode = #tpu.pipeline_mode<synchronous>, transform_indices = @transform_3, window_bounds = array<i64: 128, 128>}, {transform_indices = @transform_4, window_bounds = array<i64: 1, 128>}, {transform_indices = @transform_5, window_bounds = array<i64: 256, 128>}]} {
    %c128_i32 = arith.constant 128 : i32
    %0 = arith.muli %arg1, %c128_i32 : i32
    %1 = tpu.assume_multiple %0, 128 : i32
    %2 = arith.index_cast %1 : i32 to index
    %c0 = arith.constant 0 : index
    %3 = vector.load %arg3[%2, %c0] : memref<128x128xf32, #tpu.memory_space<vmem>>, vector<128x128xf32>
    %4 = arith.index_cast %1 : i32 to index
    %c0_0 = arith.constant 0 : index
    %5 = vector.load %arg4[%4, %c0_0] : memref<128x128xf32, #tpu.memory_space<vmem>>, vector<128x128xf32>
    %6 = arith.index_cast %1 : i32 to index
    %c0_1 = arith.constant 0 : index
    %7 = vector.load %arg5[%6, %c0_1] : memref<128x128xf32, #tpu.memory_space<vmem>>, vector<128x128xf32>
    %8 = arith.mulf %5, %7 : vector<128x128xf32>
    %cst = arith.constant 1.000000e+00 : f32
    %9 = vector.broadcast %cst : f32 to vector<128x128xf32>
    %10 = arith.addf %9, %8 : vector<128x128xf32>
    %11 = arith.mulf %3, %10 : vector<128x128xf32>
    %c0_2 = arith.constant 0 : index
    %c0_3 = arith.constant 0 : index
    %12 = vector.load %arg2[%c0_2, %c0_3] : memref<256x128xf32, #tpu.memory_space<vmem>>, vector<256x128xf32>
    %cst_4 = arith.constant dense<0.000000e+00> : vector<256x128xf32>
    %13 = tpu.matmul %12, %11, %cst_4 {dimension_numbers = #tpu.dot_dimension_numbers<[1], [1], [0], [0], [0, 0, 1, 0], [], []>} : vector<256x128xf32>, vector<128x128xf32>, vector<256x128xf32> -> vector<256x128xf32>
    %c0_5 = arith.constant 0 : index
    %c0_6 = arith.constant 0 : index
    %14 = vector.load %arg6[%c0_5, %c0_6] : memref<1x128xf32, #tpu.memory_space<vmem>>, vector<1x128xf32>
    %15 = vector.broadcast %14 : vector<1x128xf32> to vector<256x128xf32>
    %16 = arith.addf %13, %15 : vector<256x128xf32>
    %c0_7 = arith.constant 0 : index
    %c0_8 = arith.constant 0 : index
    %17 = vector.load %arg7[%c0_7, %c0_8] : memref<256x128xf32, #tpu.memory_space<vmem>>, vector<256x128xf32>
    tpu.vector_store %arg7[%c0_7, %c0_8], %16 {strides = array<i32>} : memref<256x128xf32, #tpu.memory_space<vmem>>, vector<256x128xf32>,
    return
  }
  func.func @transform_0(%arg0: i32, %arg1: i32) -> (i32, i32) {
    %c0_i32 = arith.constant 0 : i32
    %c0_i32_0 = arith.constant 0 : i32
    return %arg0, %c0_i32 : i32, i32
  }
  func.func @transform_1(%arg0: i32, %arg1: i32) -> (i32, i32) {
    %c0_i32 = arith.constant 0 : i32
    %c0_i32_0 = arith.constant 0 : i32
    %c0_i32_1 = arith.constant 0 : i32
    return %c0_i32, %c0_i32_0 : i32, i32
  }
  func.func @transform_2(%arg0: i32, %arg1: i32) -> (i32, i32) {
    %c0_i32 = arith.constant 0 : i32
    %c0_i32_0 = arith.constant 0 : i32
    %c0_i32_1 = arith.constant 0 : i32
    return %c0_i32, %c0_i32_0 : i32, i32
  }
  func.func @transform_3(%arg0: i32, %arg1: i32) -> (i32, i32) {
    %c0_i32 = arith.constant 0 : i32
    %c0_i32_0 = arith.constant 0 : i32
    %c0_i32_1 = arith.constant 0 : i32
    return %c0_i32, %c0_i32_0 : i32, i32
  }
  func.func @transform_4(%arg0: i32, %arg1: i32) -> (i32, i32) {
    %c0_i32 = arith.constant 0 : i32
    %c0_i32_0 = arith.constant 0 : i32
    return %c0_i32, %arg1 : i32, i32
  }
  func.func @transform_5(%arg0: i32, %arg1: i32) -> (i32, i32) {
    %c0_i32 = arith.constant 0 : i32
    return %arg0, %arg1 : i32, i32
  }
}

</mosaic_0001>

<llo_original>
// kernel: tpu_custom_call.1
$region0: #{tpu_custom_call.1}
  #allocation0 [shape = 'u32[]', space=smem, size = 0x4, offset = 0x4, fixed_abs, tag = 'smem constant byte address 0x4 - core index']
  #allocation1 [shape = 'u32[144,128]{1,0:T(1,128)}', space=vmem, size = 0x12000, scoped, tag = 'internal scratch']
  %s0 = inlined_call_operand.hbm [shape: f32[512,128], index: 0, kind: input, shape index: {}]
  %s1 = inlined_call_operand.hbm [shape: f32[128,128], index: 1, kind: input, shape index: {}]
  %s2 = inlined_call_operand.hbm [shape: f32[128,128], index: 2, kind: input, shape index: {}]
  %s3 = inlined_call_operand.hbm [shape: f32[128,128], index: 3, kind: input, shape index: {}]
  %s4 = inlined_call_operand.vmem [shape: f32[1,128], index: 4, kind: input, shape index: {}]
  %s5 = inlined_call_operand.hbm [shape: f32[512,128], index: 5, kind: output, shape index: {}]
  %s6 = sld [smem:[#allocation0]]
  $region69: #{tpu_custom_call.1} parent=0
    _
  %s8 = ssub.s32 1, %s6
  %s9 = scalar_select 0, %s8, %s6
  $region1: #{tpu_custom_call.1} parent=0
    #allocation2 [shape = 'u8[262144]{0}', space=vmem, size = 0x40000, scoped, tag = 'input window, operand 0']
    #allocation3 [shape = 's32[2]{0}', space=sflag, size = 0x8, scoped, tag = 'scoped memory for tpu_custom_call.1']
    #allocation4 [shape = 's32[2]{0}', space=sflag, size = 0x8, scoped, tag = 'scoped memory for tpu_custom_call.1']
    #allocation5 [shape = 'u8[65536]{0}', space=vmem, size = 0x10000, scoped, tag = 'input window, operand 1, single buffered']
    #allocation6 [shape = 's32[1]{0}', space=sflag, size = 0x4, scoped, tag = 'scoped memory for tpu_custom_call.1']
    #allocation7 [shape = 'u8[65536]{0}', space=vmem, size = 0x10000, scoped, tag = 'input window, operand 2, single buffered']
    #allocation8 [shape = 'u8[65536]{0}', space=vmem, size = 0x10000, scoped, tag = 'input window, operand 3, single buffered']
    #allocation9 [shape = 's32[1]{0}', space=sflag, size = 0x4, scoped, tag = 'scoped memory for tpu_custom_call.1']
    #allocation10 [shape = 'u8[262144]{0}', space=vmem, size = 0x40000, scoped, tag = 'output window, operand 0']
    %10 = vsyncpa [#allocation3], 0
    %s11 = scalar_lea.sflag [#allocation3], 1
    %12 = vsyncpa %s11, 0
    %13 = vsyncpa [#allocation6], 0
    %14 = vsyncpa [#allocation9], 0
    %15 = vsyncpa [#allocation4], 0
    %s16 = scalar_lea.sflag [#allocation4], 1
    %17 = vsyncpa %s16, 0
    loop: start=0, step=1, limit=4
    $region2: #{tpu_custom_call.1} parent=1 // loop_pre_header
      _
    $region3: #{tpu_custom_call.1} parent=1 // loop_header
      %s19 = sphi 0, %s23
      %p20 = scmp.ge.s32.totalorder %s19, 4
      %s26 = sphi 0, %s38
      %s27 = sphi 0, %s34
      %s28 = sphi 0, %s26
      %s29 = sphi 0, %s27
      %s30 = sphi 0, %s28
      %s31 = sphi 0, %s29
      %s41 = sphi 0, %s43
      %s44 = sphi 0, %s41
      %s45 = sphi 0, %s44
      %s61 = sphi 0, %s45
      %s65 = sphi 0, %s65
      %s67 = sphi 0, %s65
      %s68 = sphi 0, %s67
      %s82 = sphi 0, %s68
      %s86 = sphi 0, %s86
      %s88 = sphi 0, %s86
      %s89 = sphi 0, %s88
      %s103 = sphi 0, %s89
      %s107 = sphi 0, %s107
      %s109 = sphi 0, %s107
      %s110 = sphi 0, %s109
      %s124 = sphi 0, %s110
      %s130 = sphi 0, %s132
      %s133 = sphi 0, %s130
      %s134 = sphi 0, %s133
      %s150 = sphi 0, %s134
      %s158 = sphi 0, %s160
      %s161 = sphi 0, %s158
      %s162 = sphi 0, %s161
      %s178 = sphi 0, %s162
    $region4: #{tpu_custom_call.1} parent=1 // loop_header_branch
      %22 = sbr.rel (%p20) target = $region8
    $region5: #{tpu_custom_call.1} parent=1 // loop_body
      %s24 = ssub.s32 %s19, 1
      %s25 = ssub.s32 %s19, 2
      %s32 = sadd.s32 1, %s27
      %p33 = scmp.ge.s32.totalorder %s32, 1
      %s34 = scalar_select %p33, 0, %s32
      %s35 = sadd.s32 1, %s26
      %s36 = scalar_select %p33, %s35, %s26
      %p37 = scmp.ge.s32.totalorder %s36, 2
      %s38 = scalar_select %p37, 0, %s36
      %s39 = ssub.s32 %s26, %s38
      %p40 = scmp.eq.s32.totalorder %s39, 0
      %s42 = sadd.s32 %s41, 1
      %s43 = scalar_select %p40, %s41, %s42
      %p46 = pneg %p40
      %p47 = scmp.eq.s32.totalorder %s19, 1
      %p48 = por %p46, %p47
      %p49 = scmp.ne.s32.totalorder %s41, %s44
      %p50 = scmp.eq.s32.totalorder %s19, 0
      %p51 = por %p49, %p50
      %p52 = scmp.ne.s32.totalorder %s41, %s44
      %p53 = scmp.eq.s32.totalorder %s24, 1
      %p54 = por %p52, %p53
      %p55 = scmp.ne.s32.totalorder %s44, %s45
      %p56 = scmp.eq.s32.totalorder %s24, 0
      %p57 = por %p55, %p56
      %p58 = scmp.ne.s32.totalorder %s44, %s45
      %p59 = scmp.eq.s32.totalorder %s25, 1
      %p60 = por %p58, %p59
      %p62 = scmp.ne.s32.totalorder %s45, %s61
      %p63 = scmp.eq.s32.totalorder %s25, 0
      %p64 = por %p62, %p63
      %s66 = sadd.s32 %s65, 1
      %p69 = scmp.eq.s32.totalorder %s19, 1
      %p70 = scmp.ne.s32.totalorder %s65, %s67
      %p71 = scmp.eq.s32.totalorder %s19, 0
      %p72 = por %p70, %p71
      %p73 = scmp.ne.s32.totalorder %s65, %s67
      %p74 = scmp.eq.s32.totalorder %s24, 1
      %p75 = por %p73, %p74
      %p76 = scmp.ne.s32.totalorder %s67, %s68
      %p77 = scmp.eq.s32.totalorder %s24, 0
      %p78 = por %p76, %p77
      %p79 = scmp.ne.s32.totalorder %s67, %s68
      %p80 = scmp.eq.s32.totalorder %s25, 1
      %p81 = por %p79, %p80
      %p83 = scmp.ne.s32.totalorder %s68, %s82
      %p84 = scmp.eq.s32.totalorder %s25, 0
      %p85 = por %p83, %p84
      %s87 = sadd.s32 %s86, 1
      %p90 = scmp.eq.s32.totalorder %s19, 1
      %p91 = scmp.ne.s32.totalorder %s86, %s88
      %p92 = scmp.eq.s32.totalorder %s19, 0
      %p93 = por %p91, %p92
      %p94 = scmp.ne.s32.totalorder %s86, %s88
      %p95 = scmp.eq.s32.totalorder %s24, 1
      %p96 = por %p94, %p95
      %p97 = scmp.ne.s32.totalorder %s88, %s89
      %p98 = scmp.eq.s32.totalorder %s24, 0
      %p99 = por %p97, %p98
      %p100 = scmp.ne.s32.totalorder %s88, %s89
      %p101 = scmp.eq.s32.totalorder %s25, 1
      %p102 = por %p100, %p101
      %p104 = scmp.ne.s32.totalorder %s89, %s103
      %p105 = scmp.eq.s32.totalorder %s25, 0
      %p106 = por %p104, %p105
      %s108 = sadd.s32 %s107, 1
      %p111 = scmp.eq.s32.totalorder %s19, 1
      %p112 = scmp.ne.s32.totalorder %s107, %s109
      %p113 = scmp.eq.s32.totalorder %s19, 0
      %p114 = por %p112, %p113
      %p115 = scmp.ne.s32.totalorder %s107, %s109
      %p116 = scmp.eq.s32.totalorder %s24, 1
      %p117 = por %p115, %p116
      %p118 = scmp.ne.s32.totalorder %s109, %s110
      %p119 = scmp.eq.s32.totalorder %s24, 0
      %p120 = por %p118, %p119
      %p121 = scmp.ne.s32.totalorder %s109, %s110
      %p122 = scmp.eq.s32.totalorder %s25, 1
      %p123 = por %p121, %p122
      %p125 = scmp.ne.s32.totalorder %s110, %s124
      %p126 = scmp.eq.s32.totalorder %s25, 0
      %p127 = por %p125, %p126
      %s128 = ssub.s32 %s27, %s34
      %p129 = scmp.eq.s32.totalorder %s128, 0
      %s131 = sadd.s32 %s130, 1
      %s132 = scalar_select %p129, %s130, %s131
      %p135 = pneg %p129
      %p136 = scmp.eq.s32.totalorder %s19, 1
      %p137 = por %p135, %p136
      %p138 = scmp.ne.s32.totalorder %s130, %s133
      %p139 = scmp.eq.s32.totalorder %s19, 0
      %p140 = por %p138, %p139
      %p141 = scmp.ne.s32.totalorder %s130, %s133
      %p142 = scmp.eq.s32.totalorder %s24, 1
      %p143 = por %p141, %p142
      %p144 = scmp.ne.s32.totalorder %s133, %s134
      %p145 = scmp.eq.s32.totalorder %s24, 0
      %p146 = por %p144, %p145
      %p147 = scmp.ne.s32.totalorder %s133, %s134
      %p148 = scmp.eq.s32.totalorder %s25, 1
      %p149 = por %p147, %p148
      %p151 = scmp.ne.s32.totalorder %s134, %s150
      %p152 = scmp.eq.s32.totalorder %s25, 0
      %p153 = por %p151, %p152
      %s154 = ssub.s32 %s26, %s38
      %s155 = ssub.s32 %s27, %s34
      %s156 = sor.u32 %s154, %s155
      %p157 = scmp.eq.s32.totalorder %s156, 0
      %s159 = sadd.s32 %s158, 1
      %s160 = scalar_select %p157, %s158, %s159
      %p163 = pneg %p157
      %p164 = scmp.eq.s32.totalorder %s19, 1
      %p165 = por %p163, %p164
      %p166 = scmp.ne.s32.totalorder %s158, %s161
      %p167 = scmp.eq.s32.totalorder %s19, 0
      %p168 = por %p166, %p167
      %p169 = scmp.ne.s32.totalorder %s158, %s161
      %p170 = scmp.eq.s32.totalorder %s24, 1
      %p171 = por %p169, %p170
      %p172 = scmp.ne.s32.totalorder %s161, %s162
      %p173 = scmp.eq.s32.totalorder %s24, 0
      %p174 = por %p172, %p173
      %p175 = scmp.ne.s32.totalorder %s161, %s162
      %p176 = scmp.eq.s32.totalorder %s25, 1
      %p177 = por %p175, %p176
      %p179 = scmp.ne.s32.totalorder %s162, %s178
      %p180 = scmp.eq.s32.totalorder %s25, 0
      %p181 = por %p179, %p180
      %p182 = scmp.le.s32.totalorder 1, %s19
      %p183 = scmp.lt.s32.totalorder %s19, 3
      %p184 = pnand %p182, %p183
      %p185 = pneg %p184
      // Predicated region
      $region9: #{tpu_custom_call.1} parent=5 // pred_check
        _
      $region10: #{tpu_custom_call.1} parent=5 // pred_check_branch
        %187 = sbr.rel (%p184) target = $region12
      $region11: #{tpu_custom_call.1} parent=5 // pred_region
        %s188 = ssub.s32 %s19, 1
        // Predicated region
        $region13: #{tpu_custom_call.1} parent=11 // pred_check
          %p189 = pneg %p78
        $region14: #{tpu_custom_call.1} parent=11 // pred_check_branch
          %191 = sbr.rel (%p189) target = $region16
        $region15: #{tpu_custom_call.1} parent=11 // pred_region
          %s193 = ssub.s32 2048, 2048
          %194 = vsyncadd [#allocation6], %s193
          %s195 = sshll.u32 [#allocation5], 4
          %s196 = int_to_ptr.vmem [resolvable:$true] %s195
          %201 = dma.hbm_to_vmem [thread:$0]  %s1, 2048, %s196, [#allocation6], 128, 128, 8
        $region16: #{tpu_custom_call.1} parent=11 // pred_fallthru
          _
        // Predicated region
        $region17: #{tpu_custom_call.1} parent=11 // pred_check
          %p202 = pneg %p99
        $region18: #{tpu_custom_call.1} parent=11 // pred_check_branch
          %204 = sbr.rel (%p202) target = $region20
        $region19: #{tpu_custom_call.1} parent=11 // pred_region
          %s206 = ssub.s32 2048, 2048
          %207 = vsyncadd [#allocation6], %s206
          %s208 = sshll.u32 [#allocation7], 4
          %s209 = int_to_ptr.vmem [resolvable:$true] %s208
          %214 = dma.hbm_to_vmem [thread:$0]  %s2, 2048, %s209, [#allocation6], 128, 128, 8
        $region20: #{tpu_custom_call.1} parent=11 // pred_fallthru
          _
        // Predicated region
        $region21: #{tpu_custom_call.1} parent=11 // pred_check
          %p215 = pneg %p120
        $region22: #{tpu_custom_call.1} parent=11 // pred_check_branch
          %217 = sbr.rel (%p215) target = $region24
        $region23: #{tpu_custom_call.1} parent=11 // pred_region
          %s219 = ssub.s32 2048, 2048
          %220 = vsyncadd [#allocation9], %s219
          %s221 = sshll.u32 [#allocation8], 4
          %s222 = int_to_ptr.vmem [resolvable:$true] %s221
          %227 = dma.hbm_to_vmem [thread:$0]  %s3, 2048, %s222, [#allocation9], 128, 128, 8
        $region24: #{tpu_custom_call.1} parent=11 // pred_fallthru
          _
        // Predicated region
        $region25: #{tpu_custom_call.1} parent=11 // pred_check
          %p228 = pneg %p146
        $region26: #{tpu_custom_call.1} parent=11 // pred_check_branch
          %230 = sbr.rel (%p228) target = $region28
        $region27: #{tpu_custom_call.1} parent=11 // pred_region
          %p231 = scmp.lt.s32.totalorder %s29, 0
          %s232 = scalar_select %p231, %s29, 0
          %s233 = scalar_lea.vmem %s4, %s232
        $region28: #{tpu_custom_call.1} parent=11 // pred_fallthru
          _
      $region12: #{tpu_custom_call.1} parent=5 // pred_fallthru
        _
      %p234 = scmp.lt.s32.totalorder %s19, 2
      // Predicated region
      $region29: #{tpu_custom_call.1} parent=5 // pred_check
        %p235 = pneg %p234
      $region30: #{tpu_custom_call.1} parent=5 // pred_check_branch
        %237 = sbr.rel (%p235) target = $region32
      $region31: #{tpu_custom_call.1} parent=5 // pred_region
        // Predicated region
        $region33: #{tpu_custom_call.1} parent=31 // pred_check
          %p238 = pneg %p51
        $region34: #{tpu_custom_call.1} parent=31 // pred_check_branch
          %240 = sbr.rel (%p238) target = $region36
        $region35: #{tpu_custom_call.1} parent=31 // pred_region
          %s241 = sand.u32 %s41, 1
          %s242 = scalar_lea.sflag [#allocation3], %s241
          %s243 = sand.u32 %s41, 1
          %s244 = smul.addr %s243, 256
          %s245 = scalar_lea.vmem [#allocation2], %s244
          %s246 = smul.u32 32, %s26
          %s248 = ssub.s32 4096, 4096
          %249 = vsyncadd %s242, %s248
          %s250 = smul.addr %s246, 128
          %s251 = scalar_lea.hbm %s0, %s250
          %s252 = sshll.u32 %s245, 4
          %s253 = int_to_ptr.vmem [resolvable:$true] %s252
          %258 = dma.hbm_to_vmem [thread:$0]  %s251, 4096, %s253, %s242, 128, 128, 8
        $region36: #{tpu_custom_call.1} parent=31 // pred_fallthru
          _
      $region32: #{tpu_custom_call.1} parent=5 // pred_fallthru
        _
      %p259 = scmp.le.s32.totalorder 1, %s19
      %p260 = scmp.lt.s32.totalorder %s19, 3
      %p261 = pnand %p259, %p260
      %p262 = pneg %p261
      // Predicated region
      $region37: #{tpu_custom_call.1} parent=5 // pred_check
        _
      $region38: #{tpu_custom_call.1} parent=5 // pred_check_branch
        %264 = sbr.rel (%p261) target = $region40
      $region39: #{tpu_custom_call.1} parent=5 // pred_region
        %s265 = ssub.s32 %s19, 1
        %s266 = sand.u32 %s44, 1
        %s267 = scalar_lea.sflag [#allocation3], %s266
        %s268 = sand.u32 %s44, 1
        %s269 = smul.addr %s268, 256
        %s270 = scalar_lea.vmem [#allocation2], %s269
        // Predicated region
        $region41: #{tpu_custom_call.1} parent=39 // pred_check
          %p271 = pneg %p57
        $region42: #{tpu_custom_call.1} parent=39 // pred_check_branch
          %273 = sbr.rel (%p271) target = $region44
        $region43: #{tpu_custom_call.1} parent=39 // pred_region
          %274 = dma.done %s267, 4096
        $region44: #{tpu_custom_call.1} parent=39 // pred_fallthru
          _
        // Predicated region
        $region45: #{tpu_custom_call.1} parent=39 // pred_check
          %p275 = pneg %p78
        $region46: #{tpu_custom_call.1} parent=39 // pred_check_branch
          %277 = sbr.rel (%p275) target = $region48
        $region47: #{tpu_custom_call.1} parent=39 // pred_region
          %278 = dma.done [#allocation6], 2048
        $region48: #{tpu_custom_call.1} parent=39 // pred_fallthru
          _
        // Predicated region
        $region49: #{tpu_custom_call.1} parent=39 // pred_check
          %p279 = pneg %p99
        $region50: #{tpu_custom_call.1} parent=39 // pred_check_branch
          %281 = sbr.rel (%p279) target = $region52
        $region51: #{tpu_custom_call.1} parent=39 // pred_region
          %282 = dma.done [#allocation6], 2048
        $region52: #{tpu_custom_call.1} parent=39 // pred_fallthru
          _
        // Predicated region
        $region53: #{tpu_custom_call.1} parent=39 // pred_check
          %p283 = pneg %p120
        $region54: #{tpu_custom_call.1} parent=39 // pred_check_branch
          %285 = sbr.rel (%p283) target = $region56
        $region55: #{tpu_custom_call.1} parent=39 // pred_region
          %286 = dma.done [#allocation9], 2048
        $region56: #{tpu_custom_call.1} parent=39 // pred_fallthru
          _
        %s287 = sand.u32 %s44, 1
        %s288 = scalar_lea.sflag [#allocation3], %s287
        %s289 = sand.u32 %s44, 1
        %s290 = smul.addr %s289, 256
        %s291 = scalar_lea.vmem [#allocation2], %s290
        %p292 = pneg %p57
        %p293 = pneg %p54
        %p294 = pneg %p78
        %p295 = pneg %p75
        %p296 = pneg %p99
        %p297 = pneg %p96
        %p298 = pneg %p120
        %p299 = pneg %p117
        %p300 = scmp.lt.s32.totalorder %s29, 0
        %s301 = scalar_select %p300, %s29, 0
        %s302 = scalar_lea.vmem %s4, %s301
        %p303 = pneg %p146
        %p304 = pneg %p143
        %p305 = pneg %p174
        %p306 = pneg %p171
        %s307 = sand.u32 %s161, 1
        %s308 = scalar_lea.sflag [#allocation4], %s307
        %s309 = sand.u32 %s161, 1
        %s310 = smul.addr %s309, 256
        %s311 = scalar_lea.vmem [#allocation10], %s310
        %s312 = smul.u32 32, %s28
        %p313 = scmp.lt.s32.totalorder %s29, 0
        %s314 = scalar_select %p313, %s29, 0
        %s315 = scalar_lea.vmem %s4, %s314
        %s316 = smul.u32 32, %s28
        %s317 = smul.u32 %s29, 128
        %s318 = scalar_lea.vmem [#allocation5], %s317
        %v319 = vld [vmem:[%s318] sm:$0xff]
        %v320 = vld [vmem:[%s318 + $0x8] sm:$0xff]
        %v321 = vld [vmem:[%s318 + $0x10] sm:$0xff]
        %v322 = vld [vmem:[%s318 + $0x18] sm:$0xff]
        %v323 = vld [vmem:[%s318 + $0x20] sm:$0xff]
        %v324 = vld [vmem:[%s318 + $0x28] sm:$0xff]
        %v325 = vld [vmem:[%s318 + $0x30] sm:$0xff]
        %v326 = vld [vmem:[%s318 + $0x38] sm:$0xff]
        %v327 = vld [vmem:[%s318 + $0x40] sm:$0xff]
        %v328 = vld [vmem:[%s318 + $0x48] sm:$0xff]
        %v329 = vld [vmem:[%s318 + $0x50] sm:$0xff]
        %v330 = vld [vmem:[%s318 + $0x58] sm:$0xff]
        %v331 = vld [vmem:[%s318 + $0x60] sm:$0xff]
        %v332 = vld [vmem:[%s318 + $0x68] sm:$0xff]
        %v333 = vld [vmem:[%s318 + $0x70] sm:$0xff]
        %v334 = vld [vmem:[%s318 + $0x78] sm:$0xff]
        %s335 = scalar_lea.vmem [#allocation7], %s317
        %v336 = vld [vmem:[%s335] sm:$0xff]
        %v337 = vld [vmem:[%s335 + $0x8] sm:$0xff]
        %v338 = vld [vmem:[%s335 + $0x10] sm:$0xff]
        %v339 = vld [vmem:[%s335 + $0x18] sm:$0xff]
        %v340 = vld [vmem:[%s335 + $0x20] sm:$0xff]
        %v341 = vld [vmem:[%s335 + $0x28] sm:$0xff]
        %v342 = vld [vmem:[%s335 + $0x30] sm:$0xff]
        %v343 = vld [vmem:[%s335 + $0x38] sm:$0xff]
        %v344 = vld [vmem:[%s335 + $0x40] sm:$0xff]
        %v345 = vld [vmem:[%s335 + $0x48] sm:$0xff]
        %v346 = vld [vmem:[%s335 + $0x50] sm:$0xff]
        %v347 = vld [vmem:[%s335 + $0x58] sm:$0xff]
        %v348 = vld [vmem:[%s335 + $0x60] sm:$0xff]
        %v349 = vld [vmem:[%s335 + $0x68] sm:$0xff]
        %v350 = vld [vmem:[%s335 + $0x70] sm:$0xff]
        %v351 = vld [vmem:[%s335 + $0x78] sm:$0xff]
        %s352 = scalar_lea.vmem [#allocation8], %s317
        %v353 = vld [vmem:[%s352] sm:$0xff]
        %v354 = vld [vmem:[%s352 + $0x8] sm:$0xff]
        %v355 = vld [vmem:[%s352 + $0x10] sm:$0xff]
        %v356 = vld [vmem:[%s352 + $0x18] sm:$0xff]
        %v357 = vld [vmem:[%s352 + $0x20] sm:$0xff]
        %v358 = vld [vmem:[%s352 + $0x28] sm:$0xff]
        %v359 = vld [vmem:[%s352 + $0x30] sm:$0xff]
        %v360 = vld [vmem:[%s352 + $0x38] sm:$0xff]
        %v361 = vld [vmem:[%s352 + $0x40] sm:$0xff]
        %v362 = vld [vmem:[%s352 + $0x48] sm:$0xff]
        %v363 = vld [vmem:[%s352 + $0x50] sm:$0xff]
        %v364 = vld [vmem:[%s352 + $0x58] sm:$0xff]
        %v365 = vld [vmem:[%s352 + $0x60] sm:$0xff]
        %v366 = vld [vmem:[%s352 + $0x68] sm:$0xff]
        %v367 = vld [vmem:[%s352 + $0x70] sm:$0xff]
        %v368 = vld [vmem:[%s352 + $0x78] sm:$0xff]
        %v369 = vmul.f32 %v336, %v353
        %v370 = vmul.f32 %v337, %v354
        %v371 = vmul.f32 %v338, %v355
        %v372 = vmul.f32 %v339, %v356
        %v373 = vmul.f32 %v340, %v357
        %v374 = vmul.f32 %v341, %v358
        %v375 = vmul.f32 %v342, %v359
        %v376 = vmul.f32 %v343, %v360
        %v377 = vmul.f32 %v344, %v361
        %v378 = vmul.f32 %v345, %v362
        %v379 = vmul.f32 %v346, %v363
        %v380 = vmul.f32 %v347, %v364
        %v381 = vmul.f32 %v348, %v365
        %v382 = vmul.f32 %v349, %v366
        %v383 = vmul.f32 %v350, %v367
        %v384 = vmul.f32 %v351, %v368
        %v385 = vadd.f32 %v369, 1.0
        %v386 = vadd.f32 %v370, 1.0
        %v387 = vadd.f32 %v371, 1.0
        %v388 = vadd.f32 %v372, 1.0
        %v389 = vadd.f32 %v373, 1.0
        %v390 = vadd.f32 %v374, 1.0
        %v391 = vadd.f32 %v375, 1.0
        %v392 = vadd.f32 %v376, 1.0
        %v393 = vadd.f32 %v377, 1.0
        %v394 = vadd.f32 %v378, 1.0
        %v395 = vadd.f32 %v379, 1.0
        %v396 = vadd.f32 %v380, 1.0
        %v397 = vadd.f32 %v381, 1.0
        %v398 = vadd.f32 %v382, 1.0
        %v399 = vadd.f32 %v383, 1.0
        %v400 = vadd.f32 %v384, 1.0
        %v401 = vmul.f32 %v319, %v385
        %v402 = vmul.f32 %v320, %v386
        %v403 = vmul.f32 %v321, %v387
        %v404 = vmul.f32 %v322, %v388
        %v405 = vmul.f32 %v323, %v389
        %v406 = vmul.f32 %v324, %v390
        %v407 = vmul.f32 %v325, %v391
        %v408 = vmul.f32 %v326, %v392
        %v409 = vmul.f32 %v327, %v393
        %v410 = vmul.f32 %v328, %v394
        %v411 = vmul.f32 %v329, %v395
        %v412 = vmul.f32 %v330, %v396
        %v413 = vmul.f32 %v331, %v397
        %v414 = vmul.f32 %v332, %v398
        %v415 = vmul.f32 %v333, %v399
        %v416 = vmul.f32 %v334, %v400
        %v417 = vld [vmem:[%s270] sm:$0xff]
        %v418 = vld [vmem:[%s270 + $0x8] sm:$0xff]
        %v419 = vld [vmem:[%s270 + $0x10] sm:$0xff]
        %v420 = vld [vmem:[%s270 + $0x18] sm:$0xff]
        %v421 = vld [vmem:[%s270 + $0x20] sm:$0xff]
        %v422 = vld [vmem:[%s270 + $0x28] sm:$0xff]
        %v423 = vld [vmem:[%s270 + $0x30] sm:$0xff]
        %v424 = vld [vmem:[%s270 + $0x38] sm:$0xff]
        %v425 = vld [vmem:[%s270 + $0x40] sm:$0xff]
        %v426 = vld [vmem:[%s270 + $0x48] sm:$0xff]
        %v427 = vld [vmem:[%s270 + $0x50] sm:$0xff]
        %v428 = vld [vmem:[%s270 + $0x58] sm:$0xff]
        %v429 = vld [vmem:[%s270 + $0x60] sm:$0xff]
        %v430 = vld [vmem:[%s270 + $0x68] sm:$0xff]
        %v431 = vld [vmem:[%s270 + $0x70] sm:$0xff]
        %v432 = vld [vmem:[%s270 + $0x78] sm:$0xff]
        %v433 = vld [vmem:[%s270 + $0x80] sm:$0xff]
        %v434 = vld [vmem:[%s270 + $0x88] sm:$0xff]
        %v435 = vld [vmem:[%s270 + $0x90] sm:$0xff]
        %v436 = vld [vmem:[%s270 + $0x98] sm:$0xff]
        %v437 = vld [vmem:[%s270 + $0xa0] sm:$0xff]
        %v438 = vld [vmem:[%s270 + $0xa8] sm:$0xff]
        %v439 = vld [vmem:[%s270 + $0xb0] sm:$0xff]
        %v440 = vld [vmem:[%s270 + $0xb8] sm:$0xff]
        %v441 = vld [vmem:[%s270 + $0xc0] sm:$0xff]
        %v442 = vld [vmem:[%s270 + $0xc8] sm:$0xff]
        %v443 = vld [vmem:[%s270 + $0xd0] sm:$0xff]
        %v444 = vld [vmem:[%s270 + $0xd8] sm:$0xff]
        %v445 = vld [vmem:[%s270 + $0xe0] sm:$0xff]
        %v446 = vld [vmem:[%s270 + $0xe8] sm:$0xff]
        %v447 = vld [vmem:[%s270 + $0xf0] sm:$0xff]
        %v448 = vld [vmem:[%s270 + $0xf8] sm:$0xff]
        %v449 = vld [vmem:[%s315] sm:$0x1]
        %v451 = vlaneseq
        %v452 = vshrl.u32 %v451, 7
        %v453 = vsub.s32 0, %v452
        %v454 = vrot.slane %v449, %v453
        %456 = vmatprep.subr.mxu0 0.0
        %457 = vmatpush1.xpose.msra.mxu0 %v401
        %458 = vmatprep.subr.mxu0 0.0
        %459 = vmatpush1.xpose.msra.mxu0 %v402
        %460 = vmatprep.subr.mxu0 0.0
        %461 = vmatpush1.xpose.msra.mxu0 %v403
        %462 = vmatprep.subr.mxu0 0.0
        %463 = vmatpush1.xpose.msra.mxu0 %v404
        %464 = vmatprep.subr.mxu0 0.0
        %465 = vmatpush1.xpose.msra.mxu0 %v405
        %466 = vmatprep.subr.mxu0 0.0
        %467 = vmatpush1.xpose.msra.mxu0 %v406
        %468 = vmatprep.subr.mxu0 0.0
        %469 = vmatpush1.xpose.msra.mxu0 %v407
        %470 = vmatprep.subr.mxu0 0.0
        %471 = vmatpush1.xpose.msra.mxu0 %v408
        %472 = vmatprep.subr.mxu0 0.0
        %473 = vmatpush1.xpose.msra.mxu0 %v409
        %474 = vmatprep.subr.mxu0 0.0
        %475 = vmatpush1.xpose.msra.mxu0 %v410
        %476 = vmatprep.subr.mxu0 0.0
        %477 = vmatpush1.xpose.msra.mxu0 %v411
        %478 = vmatprep.subr.mxu0 0.0
        %479 = vmatpush1.xpose.msra.mxu0 %v412
        %480 = vmatprep.subr.mxu0 0.0
        %481 = vmatpush1.xpose.msra.mxu0 %v413
        %482 = vmatprep.subr.mxu0 0.0
        %483 = vmatpush1.xpose.msra.mxu0 %v414
        %484 = vmatprep.subr.mxu0 0.0
        %485 = vmatpush1.xpose.msra.mxu0 %v415
        %486 = vmatprep.subr.mxu0 0.0
        %487 = vmatpush1.xpose.msra.mxu0 %v416
        %488 = vmatprep.subr.mxu0 0.0
        %489 = vmatpush1.xpose.msra.mxu0 0.0
        %490 = vmatprep.subr.mxu0 0.0
        %491 = vmatpush1.xpose.msra.mxu0 0.0
        %492 = vmatprep.subr.mxu0 0.0
        %493 = vmatpush1.xpose.msra.mxu0 0.0
        %494 = vmatprep.subr.mxu0 0.0
        %495 = vmatpush1.xpose.msra.mxu0 0.0
        %496 = vmatprep.subr.mxu0 0.0
        %497 = vmatpush1.xpose.msra.mxu0 0.0
        %498 = vmatprep.subr.mxu0 0.0
        %499 = vmatpush1.xpose.msra.mxu0 0.0
        %500 = vmatprep.subr.mxu0 0.0
        %501 = vmatpush1.xpose.msra.mxu0 0.0
        %502 = vmatprep.subr.mxu0 0.0
        %503 = vmatpush1.xpose.msra.mxu0 0.0
        %504 = vmatprep.subr.mxu0 0.0
        %505 = vmatpush1.xpose.msra.mxu0 0.0
        %506 = vmatprep.subr.mxu0 0.0
        %507 = vmatpush1.xpose.msra.mxu0 0.0
        %508 = vmatprep.subr.mxu0 0.0
        %509 = vmatpush1.xpose.msra.mxu0 0.0
        %510 = vmatprep.subr.mxu0 0.0
        %511 = vmatpush1.xpose.msra.mxu0 0.0
        %512 = vmatprep.subr.mxu0 0.0
        %513 = vmatpush1.xpose.msra.mxu0 0.0
        %514 = vmatprep.subr.mxu0 0.0
        %515 = vmatpush1.xpose.msra.mxu0 0.0
        %516 = vmatprep.subr.mxu0 0.0
        %517 = vmatpush1.xpose.msra.mxu0 0.0
        %518 = vmatprep.subr.mxu0 0.0
        %519 = vmatpush1.xpose.msra.mxu0 0.0
        %520 = vmatprep.mubr.f32.mxu0 0.0
        %521 = vmatmul.mubr.f32.gmra.mrb[0].mxu0 %v417
        %v522 = vpop.f32.mrb[0].mxu0
        %v523 = vadd.f32 %v454, %v522
        %v524 = vpop.f32.mrb[0].mxu0
        %525 = vmatprep.mubr.f32.mxu0 0.0
        %526 = vmatmul.mubr.f32.gmra.mrb[0].mxu0 %v418
        %v527 = vpop.f32.mrb[0].mxu0
        %v528 = vadd.f32 %v454, %v527
        %v529 = vpop.f32.mrb[0].mxu0
        %530 = vmatprep.mubr.f32.mxu0 0.0
        %531 = vmatmul.mubr.f32.gmra.mrb[0].mxu0 %v419
        %v532 = vpop.f32.mrb[0].mxu0
        %v533 = vadd.f32 %v454, %v532
        %v534 = vpop.f32.mrb[0].mxu0
        %535 = vmatprep.mubr.f32.mxu0 0.0
        %536 = vmatmul.mubr.f32.gmra.mrb[0].mxu0 %v420
        %v537 = vpop.f32.mrb[0].mxu0
        %v538 = vadd.f32 %v454, %v537
        %v539 = vpop.f32.mrb[0].mxu0
        %540 = vmatprep.mubr.f32.mxu0 0.0
        %541 = vmatmul.mubr.f32.gmra.mrb[0].mxu0 %v421
        %v542 = vpop.f32.mrb[0].mxu0
        %v543 = vadd.f32 %v454, %v542
        %v544 = vpop.f32.mrb[0].mxu0
        %545 = vmatprep.mubr.f32.mxu0 0.0
        %546 = vmatmul.mubr.f32.gmra.mrb[0].mxu0 %v422
        %v547 = vpop.f32.mrb[0].mxu0
        %v548 = vadd.f32 %v454, %v547
        %v549 = vpop.f32.mrb[0].mxu0
        %550 = vmatprep.mubr.f32.mxu0 0.0
        %551 = vmatmul.mubr.f32.gmra.mrb[0].mxu0 %v423
        %v552 = vpop.f32.mrb[0].mxu0
        %v553 = vadd.f32 %v454, %v552
        %v554 = vpop.f32.mrb[0].mxu0
        %555 = vmatprep.mubr.f32.mxu0 0.0
        %556 = vmatmul.mubr.f32.gmra.mrb[0].mxu0 %v424
        %v557 = vpop.f32.mrb[0].mxu0
        %v558 = vadd.f32 %v454, %v557
        %v559 = vpop.f32.mrb[0].mxu0
        %560 = vmatprep.mubr.f32.mxu0 0.0
        %561 = vmatmul.mubr.f32.gmra.mrb[0].mxu0 %v425
        %v562 = vpop.f32.mrb[0].mxu0
        %v563 = vadd.f32 %v454, %v562
        %v564 = vpop.f32.mrb[0].mxu0
        %565 = vmatprep.mubr.f32.mxu0 0.0
        %566 = vmatmul.mubr.f32.gmra.mrb[0].mxu0 %v426
        %v567 = vpop.f32.mrb[0].mxu0
        %v568 = vadd.f32 %v454, %v567
        %v569 = vpop.f32.mrb[0].mxu0
        %570 = vmatprep.mubr.f32.mxu0 0.0
        %571 = vmatmul.mubr.f32.gmra.mrb[0].mxu0 %v427
        %v572 = vpop.f32.mrb[0].mxu0
        %v573 = vadd.f32 %v454, %v572
        %v574 = vpop.f32.mrb[0].mxu0
        %575 = vmatprep.mubr.f32.mxu0 0.0
        %576 = vmatmul.mubr.f32.gmra.mrb[0].mxu0 %v428
        %v577 = vpop.f32.mrb[0].mxu0
        %v578 = vadd.f32 %v454, %v577
        %v579 = vpop.f32.mrb[0].mxu0
        %580 = vmatprep.mubr.f32.mxu0 0.0
        %581 = vmatmul.mubr.f32.gmra.mrb[0].mxu0 %v429
        %v582 = vpop.f32.mrb[0].mxu0
        %v583 = vadd.f32 %v454, %v582
        %v584 = vpop.f32.mrb[0].mxu0
        %585 = vmatprep.mubr.f32.mxu0 0.0
        %586 = vmatmul.mubr.f32.gmra.mrb[0].mxu0 %v430
        %v587 = vpop.f32.mrb[0].mxu0
        %v588 = vadd.f32 %v454, %v587
        %v589 = vpop.f32.mrb[0].mxu0
        %590 = vmatprep.mubr.f32.mxu0 0.0
        %591 = vmatmul.mubr.f32.gmra.mrb[0].mxu0 %v431
        %v592 = vpop.f32.mrb[0].mxu0
        %v593 = vadd.f32 %v454, %v592
        %v594 = vpop.f32.mrb[0].mxu0
        %595 = vmatprep.mubr.f32.mxu0 0.0
        %596 = vmatmul.mubr.f32.gmra.mrb[0].mxu0 %v432
        %v597 = vpop.f32.mrb[0].mxu0
        %v598 = vadd.f32 %v454, %v597
        %v599 = vpop.f32.mrb[0].mxu0
        %600 = vmatprep.mubr.f32.mxu0 0.0
        %601 = vmatmul.mubr.f32.gmra.mrb[0].mxu0 %v433
        %v602 = vpop.f32.mrb[0].mxu0
        %v603 = vadd.f32 %v454, %v602
        %v604 = vpop.f32.mrb[0].mxu0
        %605 = vmatprep.mubr.f32.mxu0 0.0
        %606 = vmatmul.mubr.f32.gmra.mrb[0].mxu0 %v434
        %v607 = vpop.f32.mrb[0].mxu0
        %v608 = vadd.f32 %v454, %v607
        %v609 = vpop.f32.mrb[0].mxu0
        %610 = vmatprep.mubr.f32.mxu0 0.0
        %611 = vmatmul.mubr.f32.gmra.mrb[0].mxu0 %v435
        %v612 = vpop.f32.mrb[0].mxu0
        %v613 = vadd.f32 %v454, %v612
        %v614 = vpop.f32.mrb[0].mxu0
        %615 = vmatprep.mubr.f32.mxu0 0.0
        %616 = vmatmul.mubr.f32.gmra.mrb[0].mxu0 %v436
        %v617 = vpop.f32.mrb[0].mxu0
        %v618 = vadd.f32 %v454, %v617
        %v619 = vpop.f32.mrb[0].mxu0
        %620 = vmatprep.mubr.f32.mxu0 0.0
        %621 = vmatmul.mubr.f32.gmra.mrb[0].mxu0 %v437
        %v622 = vpop.f32.mrb[0].mxu0
        %v623 = vadd.f32 %v454, %v622
        %v624 = vpop.f32.mrb[0].mxu0
        %625 = vmatprep.mubr.f32.mxu0 0.0
        %626 = vmatmul.mubr.f32.gmra.mrb[0].mxu0 %v438
        %v627 = vpop.f32.mrb[0].mxu0
        %v628 = vadd.f32 %v454, %v627
        %v629 = vpop.f32.mrb[0].mxu0
        %630 = vmatprep.mubr.f32.mxu0 0.0
        %631 = vmatmul.mubr.f32.gmra.mrb[0].mxu0 %v439
        %v632 = vpop.f32.mrb[0].mxu0
        %v633 = vadd.f32 %v454, %v632
        %v634 = vpop.f32.mrb[0].mxu0
        %635 = vmatprep.mubr.f32.mxu0 0.0
        %636 = vmatmul.mubr.f32.gmra.mrb[0].mxu0 %v440
        %v637 = vpop.f32.mrb[0].mxu0
        %v638 = vadd.f32 %v454, %v637
        %v639 = vpop.f32.mrb[0].mxu0
        %640 = vmatprep.mubr.f32.mxu0 0.0
        %641 = vmatmul.mubr.f32.gmra.mrb[0].mxu0 %v441
        %v642 = vpop.f32.mrb[0].mxu0
        %v643 = vadd.f32 %v454, %v642
        %v644 = vpop.f32.mrb[0].mxu0
        %645 = vmatprep.mubr.f32.mxu0 0.0
        %646 = vmatmul.mubr.f32.gmra.mrb[0].mxu0 %v442
        %v647 = vpop.f32.mrb[0].mxu0
        %v648 = vadd.f32 %v454, %v647
        %v649 = vpop.f32.mrb[0].mxu0
        %650 = vmatprep.mubr.f32.mxu0 0.0
        %651 = vmatmul.mubr.f32.gmra.mrb[0].mxu0 %v443
        %v652 = vpop.f32.mrb[0].mxu0
        %v653 = vadd.f32 %v454, %v652
        %v654 = vpop.f32.mrb[0].mxu0
        %655 = vmatprep.mubr.f32.mxu0 0.0
        %656 = vmatmul.mubr.f32.gmra.mrb[0].mxu0 %v444
        %v657 = vpop.f32.mrb[0].mxu0
        %v658 = vadd.f32 %v454, %v657
        %v659 = vpop.f32.mrb[0].mxu0
        %660 = vmatprep.mubr.f32.mxu0 0.0
        %661 = vmatmul.mubr.f32.gmra.mrb[0].mxu0 %v445
        %v662 = vpop.f32.mrb[0].mxu0
        %v663 = vadd.f32 %v454, %v662
        %v664 = vpop.f32.mrb[0].mxu0
        %665 = vmatprep.mubr.f32.mxu0 0.0
        %666 = vmatmul.mubr.f32.gmra.mrb[0].mxu0 %v446
        %v667 = vpop.f32.mrb[0].mxu0
        %v668 = vadd.f32 %v454, %v667
        %v669 = vpop.f32.mrb[0].mxu0
        %670 = vmatprep.mubr.f32.mxu0 0.0
        %671 = vmatmul.mubr.f32.gmra.mrb[0].mxu0 %v447
        %v672 = vpop.f32.mrb[0].mxu0
        %v673 = vadd.f32 %v454, %v672
        %v674 = vpop.f32.mrb[0].mxu0
        %675 = vmatprep.mubr.f32.mxu0 0.0
        %676 = vmatmul.mubr.f32.gmra.mrb[0].mxu0 %v448
        %v677 = vpop.f32.mrb[0].mxu0
        %v678 = vadd.f32 %v454, %v677
        %v679 = vpop.f32.mrb[0].mxu0
        %680 = vdwg.mxu0
        %681 = vst [vmem:[%s311] sm:$0xff] %v523
        %682 = vst [vmem:[%s311 + $0x8] sm:$0xff] %v528
        %683 = vst [vmem:[%s311 + $0x10] sm:$0xff] %v533
        %684 = vst [vmem:[%s311 + $0x18] sm:$0xff] %v538
        %685 = vst [vmem:[%s311 + $0x20] sm:$0xff] %v543
        %686 = vst [vmem:[%s311 + $0x28] sm:$0xff] %v548
        %687 = vst [vmem:[%s311 + $0x30] sm:$0xff] %v553
        %688 = vst [vmem:[%s311 + $0x38] sm:$0xff] %v558
        %689 = vst [vmem:[%s311 + $0x40] sm:$0xff] %v563
        %690 = vst [vmem:[%s311 + $0x48] sm:$0xff] %v568
        %691 = vst [vmem:[%s311 + $0x50] sm:$0xff] %v573
        %692 = vst [vmem:[%s311 + $0x58] sm:$0xff] %v578
        %693 = vst [vmem:[%s311 + $0x60] sm:$0xff] %v583
        %694 = vst [vmem:[%s311 + $0x68] sm:$0xff] %v588
        %695 = vst [vmem:[%s311 + $0x70] sm:$0xff] %v593
        %696 = vst [vmem:[%s311 + $0x78] sm:$0xff] %v598
        %697 = vst [vmem:[%s311 + $0x80] sm:$0xff] %v603
        %698 = vst [vmem:[%s311 + $0x88] sm:$0xff] %v608
        %699 = vst [vmem:[%s311 + $0x90] sm:$0xff] %v613
        %700 = vst [vmem:[%s311 + $0x98] sm:$0xff] %v618
        %701 = vst [vmem:[%s311 + $0xa0] sm:$0xff] %v623
        %702 = vst [vmem:[%s311 + $0xa8] sm:$0xff] %v628
        %703 = vst [vmem:[%s311 + $0xb0] sm:$0xff] %v633
        %704 = vst [vmem:[%s311 + $0xb8] sm:$0xff] %v638
        %705 = vst [vmem:[%s311 + $0xc0] sm:$0xff] %v643
        %706 = vst [vmem:[%s311 + $0xc8] sm:$0xff] %v648
        %707 = vst [vmem:[%s311 + $0xd0] sm:$0xff] %v653
        %708 = vst [vmem:[%s311 + $0xd8] sm:$0xff] %v658
        %709 = vst [vmem:[%s311 + $0xe0] sm:$0xff] %v663
        %710 = vst [vmem:[%s311 + $0xe8] sm:$0xff] %v668
        %711 = vst [vmem:[%s311 + $0xf0] sm:$0xff] %v673
        %712 = vst [vmem:[%s311 + $0xf8] sm:$0xff] %v678
        %s713 = sand.u32 %s161, 1
        %s714 = scalar_lea.sflag [#allocation4], %s713
        %s715 = sand.u32 %s161, 1
        %s716 = smul.addr %s715, 256
        %s717 = scalar_lea.vmem [#allocation10], %s716
        // Predicated region
        $region57: #{tpu_custom_call.1} parent=39 // pred_check
          %p718 = pneg %p171
        $region58: #{tpu_custom_call.1} parent=39 // pred_check_branch
          %720 = sbr.rel (%p718) target = $region60
        $region59: #{tpu_custom_call.1} parent=39 // pred_region
          %s721 = smul.u32 32, %s28
          %s723 = ssub.s32 4096, 4096
          %724 = vsyncadd %s714, %s723
          %s725 = sadd.s32 %s29, %s721
          %s726 = smul.addr %s725, 128
          %s727 = scalar_lea.hbm %s5, %s726
          %s728 = sshll.u32 %s717, 4
          %s729 = int_to_ptr.vmem [resolvable:$true] %s728
          %734 = dma.vmem_to_hbm [thread:$0]  %s729, 4096, %s727, %s714, 128, 128, 8
        $region60: #{tpu_custom_call.1} parent=39 // pred_fallthru
          _
      $region40: #{tpu_custom_call.1} parent=5 // pred_fallthru
        _
      %p735 = scmp.le.s32.totalorder 2, %s19
      // Predicated region
      $region61: #{tpu_custom_call.1} parent=5 // pred_check
        %p736 = pneg %p735
      $region62: #{tpu_custom_call.1} parent=5 // pred_check_branch
        %738 = sbr.rel (%p736) target = $region64
      $region63: #{tpu_custom_call.1} parent=5 // pred_region
        %s739 = ssub.s32 %s19, 2
        // Predicated region
        $region65: #{tpu_custom_call.1} parent=63 // pred_check
          %p740 = pneg %p177
        $region66: #{tpu_custom_call.1} parent=63 // pred_check_branch
          %742 = sbr.rel (%p740) target = $region68
        $region67: #{tpu_custom_call.1} parent=63 // pred_region
          %s743 = sand.u32 %s162, 1
          %s744 = scalar_lea.sflag [#allocation4], %s743
          %s745 = sand.u32 %s162, 1
          %s746 = smul.addr %s745, 256
          %s747 = scalar_lea.vmem [#allocation10], %s746
          %748 = dma.done %s744, 4096
        $region68: #{tpu_custom_call.1} parent=63 // pred_fallthru
          _
      $region64: #{tpu_custom_call.1} parent=5 // pred_fallthru
        _
    $region6: #{tpu_custom_call.1} parent=1 // loop_footer
      %s23 = sadd.s32 1, %s19
    $region7: #{tpu_custom_call.1} parent=1 // loop_footer_branch
      %18 = sbr.rel target = $region3
    $region8: #{tpu_custom_call.1} parent=1 // loop_exit
      _
    %749 = vsyncpa [#allocation3], 1
    %s750 = scalar_lea.sflag [#allocation3], 1
    %751 = vsyncpa %s750, 1
    %752 = vsyncpa [#allocation6], 1
    %753 = vsyncpa [#allocation9], 1
    %754 = vsyncpa [#allocation4], 1
    %s755 = scalar_lea.sflag [#allocation4], 1
    %756 = vsyncpa %s755, 1

</llo_original>
